<compile_context>
chip_gen: v7x
topology: tpu7x:2x2x1
jax: 0.10.0
libtpu: 0.0.40
codegen_flags: <defaults>
</compile_context>

<pallas_src>
import jax
import jax.numpy as jnp
from jax import lax
from jax.experimental import pallas as pl
from jax.experimental.pallas import tpu as pltpu


# ----------------------------------------------------------------------------
# Kernel
# ----------------------------------------------------------------------------

def _attention_head_kernel(len_ref, x_ref, wqkv_ref, bqkv_ref, o_ref):
    step = pl.program_id(0)
    Bt, S, E = x_ref.shape

    # Fused Q/K/V projection for the whole batch tile:
    # one (Bt*S, E) @ (E, 3E) bf16 MXU pass with f32 accumulation.
    x2 = x_ref[...].reshape(Bt * S, E)                       # bf16
    qkv = jnp.dot(x2, wqkv_ref[...],
                  preferred_element_type=jnp.float32)        # (Bt*S, 3E) f32
    qkv = (qkv + bqkv_ref[...]).reshape(Bt, S, 3 * E)        # bias add in f32

    # Mask building blocks: vectors instead of full (S,S) iotas.
    row = lax.broadcasted_iota(jnp.int32, (S, 1), 0)         # (S, 1)
    col = lax.broadcasted_iota(jnp.int32, (1, S), 1)         # (1, S)

    # Per-sub-batch attention (Bt is small and static -> unrolled).
    for i in range(Bt):
        q = qkv[i, :, :E].astype(jnp.bfloat16)               # scale already folded
        k = qkv[i, :, E:2 * E].astype(jnp.bfloat16)
        v = qkv[i, :, 2 * E:].astype(jnp.bfloat16)

        # q @ k^T contracting the last dim of both operands (no transpose
        # materialized in VMEM); f32 accumulation.
        scores = lax.dot_general(q, k, (((1,), (1,)), ((), ())),
                                 preferred_element_type=jnp.float32)  # (S, S)

        # Length mask: (row < L) & (col < L); masked_fill(~mask, -1e9).
        L = len_ref[step * Bt + i]                           # scalar from SMEM
        valid = (row < L) & (col < L)                        # (S,1)&(1,S)->(S,S)
        scores = jnp.where(valid, scores, jnp.float32(-1e9))

        # softmax(dim=-1) in f32 with an exact divide (numerical parity).
        m = jnp.max(scores, axis=-1, keepdims=True)
        e = jnp.exp(scores - m)
        attn = e / jnp.sum(e, axis=-1, keepdims=True)

        # TODO(synk): nn.Dropout(attention_weights) is identity here (eval mode).
        o_ref[i] = jnp.dot(attn.astype(jnp.bfloat16), v,
                           preferred_element_type=jnp.float32)


# ----------------------------------------------------------------------------
# Wrapper
# ----------------------------------------------------------------------------

def _pick_batch_tile(B, S, target_m=256):
    """Largest useful batch tile Bt (divisor of B).

    Prefer >= 2 grid steps when B >= 2 (v7x has two TensorCores and the batch
    axis is marked "parallel"); within that, the smallest tile reaching
    M = Bt*S >= target_m, else the largest available tile.
    """
    divisors = [d for d in range(1, B + 1) if B % d == 0]
    cands = [d for d in divisors if B // d >= 2] or divisors
    reaching = [d for d in cands if d * S >= target_m]
    return min(reaching) if reaching else max(cands)


def attention_head(x, wq, bq, wk, bk, wv, bv, event_lengths=None):
    """AttentionHead forward.  x: (B,S,E) f32; W*: (E,E) (y = x@W + b); b*: (E,)."""
    B, S, E = x.shape

    # Fold the 1/sqrt(E) attention scale into the query projection (one-time,
    # exact in f32), then pack Q/K/V into one lane-dense (E, 3E) bf16 weight.
    inv_sqrt_e = 1.0 / jnp.sqrt(jnp.float32(E))
    wqkv = jnp.concatenate([wq * inv_sqrt_e, wk, wv], axis=1)           # (E, 3E)
    wqkv = wqkv.astype(jnp.bfloat16)
    bqkv = jnp.concatenate([bq * inv_sqrt_e, bk, bv], axis=0)           # (3E,)
    bqkv = bqkv.reshape(1, 3 * E).astype(jnp.float32)                   # f32 bias

    x_bf16 = x.astype(jnp.bfloat16)

    if event_lengths is None:
        lens = jnp.full((B,), S, dtype=jnp.int32)   # all-true mask == no masking
    else:
        lens = event_lengths.astype(jnp.int32)

    bt = _pick_batch_tile(B, S)
    n_steps = B // bt

    return pl.pallas_call(
        _attention_head_kernel,
        grid_spec=pltpu.PrefetchScalarGridSpec(
            num_scalar_prefetch=1,                  # event_lengths -> SMEM
            grid=(n_steps,),
            in_specs=[
                pl.BlockSpec((bt, S, E), lambda b, lens: (b, 0, 0)),
                # weight/bias blocks are grid-invariant -> stay resident in VMEM
                pl.BlockSpec((E, 3 * E), lambda b, lens: (0, 0)),
                pl.BlockSpec((1, 3 * E), lambda b, lens: (0, 0)),
            ],
            out_specs=pl.BlockSpec((bt, S, E), lambda b, lens: (b, 0, 0)),
        ),
        out_shape=jax.ShapeDtypeStruct((B, S, E), jnp.float32),
        compiler_params=pltpu.CompilerParams(
            dimension_semantics=("parallel",),      # megacore-shard batch on v7x
            vmem_limit_bytes=48 * 1024 * 1024,      # room for fat tiles, < v7x 64 MiB
        ),
    )(lens, x_bf16, wqkv, bqkv)


# ----------------------------------------------------------------------------
# Pure-JAX reference (mirrors the PyTorch module) for a sanity check
# ----------------------------------------------------------------------------

def attention_head_ref(x, wq, bq, wk, bk, wv, bv, event_lengths=None):
    B, S, E = x.shape
    q = x @ wq + bq
    k = x @ wk + bk
    v = x @ wv + bv
    scores = jnp.einsum("bqe,bke->bqk", q, k) / jnp.sqrt(jnp.float32(E))
    if event_lengths is not None:
        row = jnp.arange(S).reshape(1, S, 1)
        col = jnp.arange(S).reshape(1, 1, S)
        L = event_lengths.reshape(B, 1, 1)
        mask = (row < L) & (col < L)
        scores = jnp.where(mask, scores, jnp.float32(-1e9))
    attn = jax.nn.softmax(scores, axis=-1)
    return jnp.einsum("bqk,bke->bqe", attn, v)


# ----------------------------------------------------------------------------
if __name__ == "__main__":
    # Small shapes consistent with the module; E is a multiple of 128 so the
    # output stores are lane-dense, S is a multiple of 8 (sublane tiling).
    B, S, E = 4, 16, 128

    key = jax.random.PRNGKey(0)
    kx, kq, kk, kv = jax.random.split(key, 4)

    def lin(k):  # PyTorch-style Linear init, weights stored as (in, out)
        kw, kb = jax.random.split(k)
        bound = 1.0 / jnp.sqrt(jnp.float32(E))
        w = jax.random.uniform(kw, (E, E), jnp.float32, -bound, bound)
        b = jax.random.uniform(kb, (E,), jnp.float32, -bound, bound)
        return w, b

    wq, bq = lin(kq)
    wk, bk = lin(kk)
    wv, bv = lin(kv)
    x = jax.random.normal(kx, (B, S, E), jnp.float32)
    event_lengths = jnp.array([5, 16, 9, 12], dtype=jnp.int32)

    fwd = jax.jit(attention_head)

    # Masked path.
    out = fwd(x, wq, bq, wk, bk, wv, bv, event_lengths)
    jax.block_until_ready(out)
    assert out.shape == (B, S, E)
    ref = attention_head_ref(x, wq, bq, wk, bk, wv, bv, event_lengths)
    assert jnp.allclose(out, ref, rtol=5e-2, atol=3e-2), float(
        jnp.max(jnp.abs(out - ref)))

    # Unmasked path (event_lengths=None).
    out2 = fwd(x, wq, bq, wk, bk, wv, bv, None)
    jax.block_until_ready(out2)
    ref2 = attention_head_ref(x, wq, bq, wk, bk, wv, bv, None)
    assert jnp.allclose(out2, ref2, rtol=5e-2, atol=3e-2), float(
        jnp.max(jnp.abs(out2 - ref2)))

    print("KERNEL_OK")
</pallas_src>

<mosaic_0001>
module attributes {stable_mosaic.version = 11 : i64} {
  func.func @_attention_head_kernel(%arg0: i32, %arg1: memref<4xi32, #tpu.memory_space<smem>>, %arg2: memref<2x16x128xbf16, #tpu.memory_space<vmem>>, %arg3: memref<128x384xbf16, #tpu.memory_space<vmem>>, %arg4: memref<1x384xf32, #tpu.memory_space<vmem>>, %arg5: memref<2x16x128xf32, #tpu.memory_space<vmem>>) attributes {dimension_semantics = [#tpu.dimension_semantics<parallel>], iteration_bounds = array<i64: 2>, scalar_prefetch = 1 : i64, scratch_operands = 0 : i64, tpu.core_type = #tpu.core_type<tc>, window_params = [{transform_indices = @transform_0, window_bounds = array<i64: 2, 16, 128>}, {pipeline_mode = #tpu.pipeline_mode<synchronous>, transform_indices = @transform_1, window_bounds = array<i64: 128, 384>}, {pipeline_mode = #tpu.pipeline_mode<synchronous>, transform_indices = @transform_2, window_bounds = array<i64: 1, 384>}, {transform_indices = @transform_3, window_bounds = array<i64: 2, 16, 128>}]} {
    %c0 = arith.constant 0 : index
    %c0_0 = arith.constant 0 : index
    %c0_1 = arith.constant 0 : index
    %0 = vector.load %arg2[%c0, %c0_0, %c0_1] : memref<2x16x128xbf16, #tpu.memory_space<vmem>>, vector<2x16x128xbf16>
    %1 = vector.shape_cast %0 : vector<2x16x128xbf16> to vector<32x128xbf16>
    %c0_2 = arith.constant 0 : index
    %c0_3 = arith.constant 0 : index
    %2 = vector.load %arg3[%c0_2, %c0_3] : memref<128x384xbf16, #tpu.memory_space<vmem>>, vector<128x384xbf16>
    %cst = arith.constant dense<0.000000e+00> : vector<32x384xf32>
    %3 = tpu.matmul %1, %2, %cst {dimension_numbers = #tpu.dot_dimension_numbers<[1], [0], [0], [1], [0, 0, 1, 1], [], []>} : vector<32x128xbf16>, vector<128x384xbf16>, vector<32x384xf32> -> vector<32x384xf32>
    %c0_4 = arith.constant 0 : index
    %c0_5 = arith.constant 0 : index
    %4 = vector.load %arg4[%c0_4, %c0_5] : memref<1x384xf32, #tpu.memory_space<vmem>>, vector<1x384xf32>
    %5 = vector.broadcast %4 : vector<1x384xf32> to vector<32x384xf32>
    %6 = arith.addf %3, %5 : vector<32x384xf32>
    %7 = vector.shape_cast %6 : vector<32x384xf32> to vector<2x16x384xf32>
    %8 = tpu.iota {dimensions = array<i32: 0>} : vector<16x1xi32>
    %9 = tpu.iota {dimensions = array<i32: 1>} : vector<1x16xi32>
    %10 = vector.extract_strided_slice %7 {offsets = [0, 0, 0], sizes = [1, 16, 128], strides = [1, 1, 1]} : vector<2x16x384xf32> to vector<1x16x128xf32>
    %11 = vector.shape_cast %10 : vector<1x16x128xf32> to vector<16x128xf32>
    %12 = arith.truncf %11 : vector<16x128xf32> to vector<16x128xbf16>
    %13 = vector.extract_strided_slice %7 {offsets = [0, 0, 128], sizes = [1, 16, 128], strides = [1, 1, 1]} : vector<2x16x384xf32> to vector<1x16x128xf32>
    %14 = vector.shape_cast %13 : vector<1x16x128xf32> to vector<16x128xf32>
    %15 = arith.truncf %14 : vector<16x128xf32> to vector<16x128xbf16>
    %16 = vector.extract_strided_slice %7 {offsets = [0, 0, 256], sizes = [1, 16, 128], strides = [1, 1, 1]} : vector<2x16x384xf32> to vector<1x16x128xf32>
    %17 = vector.shape_cast %16 : vector<1x16x128xf32> to vector<16x128xf32>
    %18 = arith.truncf %17 : vector<16x128xf32> to vector<16x128xbf16>
    %cst_6 = arith.constant dense<0.000000e+00> : vector<16x16xf32>
    %19 = tpu.matmul %12, %15, %cst_6 {dimension_numbers = #tpu.dot_dimension_numbers<[1], [1], [0], [0], [0, 0, 1, 0], [], []>} : vector<16x128xbf16>, vector<16x128xbf16>, vector<16x16xf32> -> vector<16x16xf32>
    %c2_i32 = arith.constant 2 : i32
    %20 = arith.muli %arg0, %c2_i32 : i32
    %c0_i32 = arith.constant 0 : i32
    %21 = arith.addi %20, %c0_i32 : i32
    %22 = arith.index_cast %21 : i32 to index
    %23 = memref.load %arg1[%22] : memref<4xi32, #tpu.memory_space<smem>>
    %24 = vector.broadcast %23 : i32 to vector<16x1xi32>
    %25 = arith.cmpi slt, %8, %24 : vector<16x1xi32>
    %26 = vector.broadcast %23 : i32 to vector<1x16xi32>
    %27 = arith.cmpi slt, %9, %26 : vector<1x16xi32>
    %28 = vector.broadcast %25 : vector<16x1xi1> to vector<16x16xi1>
    %29 = vector.broadcast %27 : vector<1x16xi1> to vector<16x16xi1>
    %30 = arith.andi %28, %29 : vector<16x16xi1>
    %cst_7 = arith.constant -1.000000e+09 : f32
    %31 = vector.broadcast %cst_7 : f32 to vector<16x16xf32>
    %32 = arith.select %30, %19, %31 : vector<16x16xi1>, vector<16x16xf32>
    %cst_8 = arith.constant dense<0xFF800000> : vector<16xf32>
    %33 = vector.multi_reduction <maximumf>, %32, %cst_8 [1] : vector<16x16xf32> to vector<16xf32>
    %34 = vector.shape_cast %33 : vector<16xf32> to vector<16x1xf32>
    %35 = vector.broadcast %34 : vector<16x1xf32> to vector<16x16xf32>
    %36 = arith.subf %32, %35 : vector<16x16xf32>
    %37 = math.exp %36 : vector<16x16xf32>
    %cst_9 = arith.constant dense<0.000000e+00> : vector<16xf32>
    %38 = vector.multi_reduction <add>, %37, %cst_9 [1] : vector<16x16xf32> to vector<16xf32>
    %39 = vector.shape_cast %38 : vector<16xf32> to vector<16x1xf32>
    %40 = vector.broadcast %39 : vector<16x1xf32> to vector<16x16xf32>
    %41 = arith.divf %37, %40 : vector<16x16xf32>
    %42 = arith.truncf %41 : vector<16x16xf32> to vector<16x16xbf16>
    %cst_10 = arith.constant dense<0.000000e+00> : vector<16x128xf32>
    %43 = tpu.matmul %42, %18, %cst_10 {dimension_numbers = #tpu.dot_dimension_numbers<[1], [0], [0], [1], [0, 0, 1, 1], [], []>} : vector<16x16xbf16>, vector<16x128xbf16>, vector<16x128xf32> -> vector<16x128xf32>
    %c0_11 = arith.constant 0 : index
    %c0_12 = arith.constant 0 : index
    %c0_13 = arith.constant 0 : index
    %44 = vector.load %arg5[%c0_11, %c0_12, %c0_13] : memref<2x16x128xf32, #tpu.memory_space<vmem>>, vector<1x16x128xf32>
    %45 = vector.shape_cast %44 : vector<1x16x128xf32> to vector<16x128xf32>
    %46 = vector.shape_cast %43 : vector<16x128xf32> to vector<1x16x128xf32>
    tpu.vector_store %arg5[%c0_11, %c0_12, %c0_13], %46 {strides = array<i32>} : memref<2x16x128xf32, #tpu.memory_space<vmem>>, vector<1x16x128xf32>,
    %47 = vector.extract_strided_slice %7 {offsets = [1, 0, 0], sizes = [1, 16, 128], strides = [1, 1, 1]} : vector<2x16x384xf32> to vector<1x16x128xf32>
    %48 = vector.shape_cast %47 : vector<1x16x128xf32> to vector<16x128xf32>
    %49 = arith.truncf %48 : vector<16x128xf32> to vector<16x128xbf16>
    %50 = vector.extract_strided_slice %7 {offsets = [1, 0, 128], sizes = [1, 16, 128], strides = [1, 1, 1]} : vector<2x16x384xf32> to vector<1x16x128xf32>
    %51 = vector.shape_cast %50 : vector<1x16x128xf32> to vector<16x128xf32>
    %52 = arith.truncf %51 : vector<16x128xf32> to vector<16x128xbf16>
    %53 = vector.extract_strided_slice %7 {offsets = [1, 0, 256], sizes = [1, 16, 128], strides = [1, 1, 1]} : vector<2x16x384xf32> to vector<1x16x128xf32>
    %54 = vector.shape_cast %53 : vector<1x16x128xf32> to vector<16x128xf32>
    %55 = arith.truncf %54 : vector<16x128xf32> to vector<16x128xbf16>
    %cst_14 = arith.constant dense<0.000000e+00> : vector<16x16xf32>
    %56 = tpu.matmul %49, %52, %cst_14 {dimension_numbers = #tpu.dot_dimension_numbers<[1], [1], [0], [0], [0, 0, 1, 0], [], []>} : vector<16x128xbf16>, vector<16x128xbf16>, vector<16x16xf32> -> vector<16x16xf32>
    %c2_i32_15 = arith.constant 2 : i32
    %57 = arith.muli %arg0, %c2_i32_15 : i32
    %c1_i32 = arith.constant 1 : i32
    %58 = arith.addi %57, %c1_i32 : i32
    %59 = arith.index_cast %58 : i32 to index
    %60 = memref.load %arg1[%59] : memref<4xi32, #tpu.memory_space<smem>>
    %61 = vector.broadcast %60 : i32 to vector<16x1xi32>
    %62 = arith.cmpi slt, %8, %61 : vector<16x1xi32>
    %63 = vector.broadcast %60 : i32 to vector<1x16xi32>
    %64 = arith.cmpi slt, %9, %63 : vector<1x16xi32>
    %65 = vector.broadcast %62 : vector<16x1xi1> to vector<16x16xi1>
    %66 = vector.broadcast %64 : vector<1x16xi1> to vector<16x16xi1>
    %67 = arith.andi %65, %66 : vector<16x16xi1>
    %cst_16 = arith.constant -1.000000e+09 : f32
    %68 = vector.broadcast %cst_16 : f32 to vector<16x16xf32>
    %69 = arith.select %67, %56, %68 : vector<16x16xi1>, vector<16x16xf32>
    %cst_17 = arith.constant dense<0xFF800000> : vector<16xf32>
    %70 = vector.multi_reduction <maximumf>, %69, %cst_17 [1] : vector<16x16xf32> to vector<16xf32>
    %71 = vector.shape_cast %70 : vector<16xf32> to vector<16x1xf32>
    %72 = vector.broadcast %71 : vector<16x1xf32> to vector<16x16xf32>
    %73 = arith.subf %69, %72 : vector<16x16xf32>
    %74 = math.exp %73 : vector<16x16xf32>
    %cst_18 = arith.constant dense<0.000000e+00> : vector<16xf32>
    %75 = vector.multi_reduction <add>, %74, %cst_18 [1] : vector<16x16xf32> to vector<16xf32>
    %76 = vector.shape_cast %75 : vector<16xf32> to vector<16x1xf32>
    %77 = vector.broadcast %76 : vector<16x1xf32> to vector<16x16xf32>
    %78 = arith.divf %74, %77 : vector<16x16xf32>
    %79 = arith.truncf %78 : vector<16x16xf32> to vector<16x16xbf16>
    %cst_19 = arith.constant dense<0.000000e+00> : vector<16x128xf32>
    %80 = tpu.matmul %79, %55, %cst_19 {dimension_numbers = #tpu.dot_dimension_numbers<[1], [0], [0], [1], [0, 0, 1, 1], [], []>} : vector<16x16xbf16>, vector<16x128xbf16>, vector<16x128xf32> -> vector<16x128xf32>
    %c1 = arith.constant 1 : index
    %c0_20 = arith.constant 0 : index
    %c0_21 = arith.constant 0 : index
    %81 = vector.load %arg5[%c1, %c0_20, %c0_21] : memref<2x16x128xf32, #tpu.memory_space<vmem>>, vector<1x16x128xf32>
    %82 = vector.shape_cast %81 : vector<1x16x128xf32> to vector<16x128xf32>
    %83 = vector.shape_cast %80 : vector<16x128xf32> to vector<1x16x128xf32>
    tpu.vector_store %arg5[%c1, %c0_20, %c0_21], %83 {strides = array<i32>} : memref<2x16x128xf32, #tpu.memory_space<vmem>>, vector<1x16x128xf32>,
    return
  }
  func.func @transform_0(%arg0: i32, %arg1: memref<4xi32, #tpu.memory_space<smem>>) -> (i32, i32, i32) {
    %c0_i32 = arith.constant 0 : i32
    %c0_i32_0 = arith.constant 0 : i32
    %c0_i32_1 = arith.constant 0 : i32
    return %arg0, %c0_i32, %c0_i32_0 : i32, i32, i32
  }
  func.func @transform_1(%arg0: i32, %arg1: memref<4xi32, #tpu.memory_space<smem>>) -> (i32, i32) {
    %c0_i32 = arith.constant 0 : i32
    %c0_i32_0 = arith.constant 0 : i32
    %c0_i32_1 = arith.constant 0 : i32
    return %c0_i32, %c0_i32_0 : i32, i32
  }
  func.func @transform_2(%arg0: i32, %arg1: memref<4xi32, #tpu.memory_space<smem>>) -> (i32, i32) {
    %c0_i32 = arith.constant 0 : i32
    %c0_i32_0 = arith.constant 0 : i32
    %c0_i32_1 = arith.constant 0 : i32
    return %c0_i32, %c0_i32_0 : i32, i32
  }
  func.func @transform_3(%arg0: i32, %arg1: memref<4xi32, #tpu.memory_space<smem>>) -> (i32, i32, i32) {
    %c0_i32 = arith.constant 0 : i32
    %c0_i32_0 = arith.constant 0 : i32
    %c0_i32_1 = arith.constant 0 : i32
    return %arg0, %c0_i32, %c0_i32_0 : i32, i32, i32
  }
}

</mosaic_0001>

<llo_original>
// kernel: attention_head.1
$region0: #{attention_head.1}
  #allocation0 [shape = 'u32[]', space=smem, size = 0x4, offset = 0x4, fixed_abs, tag = 'smem constant byte address 0x4 - core index']
  #allocation1 [shape = 'u32[144,128]{1,0:T(1,128)}', space=vmem, size = 0x12000, scoped, tag = 'internal scratch']
  #allocation2 [shape = 's32[1]{0}', space=sflag, size = 0x4, scoped, tag = 'scoped memory for attention_head.1']
  #allocation3 [shape = 'u8[512]{0}', space=smem, size = 0x200, scoped, tag = 'prefetched SMEM operand 0']
  %s0 = inlined_call_operand.vmem [shape: s32[4], index: 0, kind: input, shape index: {}]
  %s1 = inlined_call_operand.vmem [shape: bf16[4,16,128], index: 1, kind: input, shape index: {}]
  %s2 = inlined_call_operand.vmem [shape: bf16[128,384], index: 2, kind: input, shape index: {}]
  %s3 = inlined_call_operand.vmem [shape: f32[1,384], index: 3, kind: input, shape index: {}]
  %s4 = inlined_call_operand.hbm [shape: f32[4,16,128], index: 4, kind: output, shape index: {}]
  %s5 = sld [smem:[#allocation0]]
  $region45: #{attention_head.1} parent=0
    _
  %s7 = ssub.s32 1, %s5
  %s8 = scalar_select 0, %s7, %s5
  %s9 = sshll.u32 %s0, 4
  %s10 = int_to_ptr.vmem [resolvable:$true] %s9
  %12 = dma.vmem_to_smem %s10, 16, [#allocation3], [#allocation2]
  %13 = dma.done [#allocation2], 16
  %14 = sfence
  $region1: #{attention_head.1} parent=0
    #allocation4 [shape = 'u8[32768]{0}', space=vmem, size = 0x8000, scoped, tag = 'output window, operand 0']
    #allocation5 [shape = 's32[2]{0}', space=sflag, size = 0x8, scoped, tag = 'scoped memory for attention_head.1']
    %15 = vsyncpa [#allocation5], 0
    %s16 = scalar_lea.sflag [#allocation5], 1
    %17 = vsyncpa %s16, 0
    loop: start=0, step=1, limit=4
    $region2: #{attention_head.1} parent=1 // loop_pre_header
      _
    $region3: #{attention_head.1} parent=1 // loop_header
      %s19 = sphi 0, %s23
      %p20 = scmp.ge.s32.totalorder %s19, 4
      %s29 = sphi 0, %s31
      %s32 = sphi 0, %s29
      %s33 = sphi 0, %s32
      %s49 = sphi 0, %s33
      %s53 = sphi 0, %s53
      %s55 = sphi 0, %s53
      %s56 = sphi 0, %s55
      %s70 = sphi 0, %s56
      %s74 = sphi 0, %s74
      %s76 = sphi 0, %s74
      %s77 = sphi 0, %s76
      %s91 = sphi 0, %s77
      %s97 = sphi 0, %s99
      %s100 = sphi 0, %s97
      %s101 = sphi 0, %s100
      %s117 = sphi 0, %s101
    $region4: #{attention_head.1} parent=1 // loop_header_branch
      %22 = sbr.rel (%p20) target = $region8
    $region5: #{attention_head.1} parent=1 // loop_body
      %s24 = ssub.s32 %s19, 1
      %s25 = ssub.s32 %s19, 2
      %s26 = sadd.s32 %s19, 1
      %s27 = ssub.s32 %s19, %s26
      %p28 = scmp.eq.s32.totalorder %s27, 0
      %s30 = sadd.s32 %s29, 1
      %s31 = scalar_select %p28, %s29, %s30
      %p34 = pneg %p28
      %p35 = scmp.eq.s32.totalorder %s19, 1
      %p36 = por %p34, %p35
      %p37 = scmp.ne.s32.totalorder %s29, %s32
      %p38 = scmp.eq.s32.totalorder %s19, 0
      %p39 = por %p37, %p38
      %p40 = scmp.ne.s32.totalorder %s29, %s32
      %p41 = scmp.eq.s32.totalorder %s24, 1
      %p42 = por %p40, %p41
      %p43 = scmp.ne.s32.totalorder %s32, %s33
      %p44 = scmp.eq.s32.totalorder %s24, 0
      %p45 = por %p43, %p44
      %p46 = scmp.ne.s32.totalorder %s32, %s33
      %p47 = scmp.eq.s32.totalorder %s25, 1
      %p48 = por %p46, %p47
      %p50 = scmp.ne.s32.totalorder %s33, %s49
      %p51 = scmp.eq.s32.totalorder %s25, 0
      %p52 = por %p50, %p51
      %s54 = sadd.s32 %s53, 1
      %p57 = scmp.eq.s32.totalorder %s19, 1
      %p58 = scmp.ne.s32.totalorder %s53, %s55
      %p59 = scmp.eq.s32.totalorder %s19, 0
      %p60 = por %p58, %p59
      %p61 = scmp.ne.s32.totalorder %s53, %s55
      %p62 = scmp.eq.s32.totalorder %s24, 1
      %p63 = por %p61, %p62
      %p64 = scmp.ne.s32.totalorder %s55, %s56
      %p65 = scmp.eq.s32.totalorder %s24, 0
      %p66 = por %p64, %p65
      %p67 = scmp.ne.s32.totalorder %s55, %s56
      %p68 = scmp.eq.s32.totalorder %s25, 1
      %p69 = por %p67, %p68
      %p71 = scmp.ne.s32.totalorder %s56, %s70
      %p72 = scmp.eq.s32.totalorder %s25, 0
      %p73 = por %p71, %p72
      %s75 = sadd.s32 %s74, 1
      %p78 = scmp.eq.s32.totalorder %s19, 1
      %p79 = scmp.ne.s32.totalorder %s74, %s76
      %p80 = scmp.eq.s32.totalorder %s19, 0
      %p81 = por %p79, %p80
      %p82 = scmp.ne.s32.totalorder %s74, %s76
      %p83 = scmp.eq.s32.totalorder %s24, 1
      %p84 = por %p82, %p83
      %p85 = scmp.ne.s32.totalorder %s76, %s77
      %p86 = scmp.eq.s32.totalorder %s24, 0
      %p87 = por %p85, %p86
      %p88 = scmp.ne.s32.totalorder %s76, %s77
      %p89 = scmp.eq.s32.totalorder %s25, 1
      %p90 = por %p88, %p89
      %p92 = scmp.ne.s32.totalorder %s77, %s91
      %p93 = scmp.eq.s32.totalorder %s25, 0
      %p94 = por %p92, %p93
      %s95 = ssub.s32 %s19, %s26
      %p96 = scmp.eq.s32.totalorder %s95, 0
      %s98 = sadd.s32 %s97, 1
      %s99 = scalar_select %p96, %s97, %s98
      %p102 = pneg %p96
      %p103 = scmp.eq.s32.totalorder %s19, 1
      %p104 = por %p102, %p103
      %p105 = scmp.ne.s32.totalorder %s97, %s100
      %p106 = scmp.eq.s32.totalorder %s19, 0
      %p107 = por %p105, %p106
      %p108 = scmp.ne.s32.totalorder %s97, %s100
      %p109 = scmp.eq.s32.totalorder %s24, 1
      %p110 = por %p108, %p109
      %p111 = scmp.ne.s32.totalorder %s100, %s101
      %p112 = scmp.eq.s32.totalorder %s24, 0
      %p113 = por %p111, %p112
      %p114 = scmp.ne.s32.totalorder %s100, %s101
      %p115 = scmp.eq.s32.totalorder %s25, 1
      %p116 = por %p114, %p115
      %p118 = scmp.ne.s32.totalorder %s101, %s117
      %p119 = scmp.eq.s32.totalorder %s25, 0
      %p120 = por %p118, %p119
      %p121 = scmp.le.s32.totalorder 1, %s19
      %p122 = scmp.lt.s32.totalorder %s19, 3
      %p123 = pnand %p121, %p122
      %p124 = pneg %p123
      // Predicated region
      $region9: #{attention_head.1} parent=5 // pred_check
        _
      $region10: #{attention_head.1} parent=5 // pred_check_branch
        %126 = sbr.rel (%p123) target = $region12
      $region11: #{attention_head.1} parent=5 // pred_region
        %s127 = ssub.s32 %s19, 1
        // Predicated region
        $region13: #{attention_head.1} parent=11 // pred_check
          %p128 = pneg %p66
        $region14: #{attention_head.1} parent=11 // pred_check_branch
          %130 = sbr.rel (%p128) target = $region16
        $region15: #{attention_head.1} parent=11 // pred_region
          _
        $region16: #{attention_head.1} parent=11 // pred_fallthru
          _
        // Predicated region
        $region17: #{attention_head.1} parent=11 // pred_check
          %p131 = pneg %p87
        $region18: #{attention_head.1} parent=11 // pred_check_branch
          %133 = sbr.rel (%p131) target = $region20
        $region19: #{attention_head.1} parent=11 // pred_region
          _
        $region20: #{attention_head.1} parent=11 // pred_fallthru
          _
      $region12: #{attention_head.1} parent=5 // pred_fallthru
        _
      %p134 = scmp.lt.s32.totalorder %s19, 2
      // Predicated region
      $region21: #{attention_head.1} parent=5 // pred_check
        %p135 = pneg %p134
      $region22: #{attention_head.1} parent=5 // pred_check_branch
        %137 = sbr.rel (%p135) target = $region24
      $region23: #{attention_head.1} parent=5 // pred_region
        // Predicated region
        $region25: #{attention_head.1} parent=23 // pred_check
          %p138 = pneg %p39
        $region26: #{attention_head.1} parent=23 // pred_check_branch
          %140 = sbr.rel (%p138) target = $region28
        $region27: #{attention_head.1} parent=23 // pred_region
          %s141 = smul.u32 2, %s19
          %p142 = scmp.lt.s32.totalorder %s141, 3
          %s143 = scalar_select %p142, %s141, 3
          %s144 = smul.addr %s143, 2
          %s145 = smul.addr %s144, 4
          %s146 = scalar_lea.vmem %s1, %s145
          %s147 = smul.u32 2, %s19
        $region28: #{attention_head.1} parent=23 // pred_fallthru
          _
      $region24: #{attention_head.1} parent=5 // pred_fallthru
        _
      %p148 = scmp.le.s32.totalorder 1, %s19
      %p149 = scmp.lt.s32.totalorder %s19, 3
      %p150 = pnand %p148, %p149
      %p151 = pneg %p150
      // Predicated region
      $region29: #{attention_head.1} parent=5 // pred_check
        _
      $region30: #{attention_head.1} parent=5 // pred_check_branch
        %153 = sbr.rel (%p150) target = $region32
      $region31: #{attention_head.1} parent=5 // pred_region
        %s154 = ssub.s32 %s19, 1
        %s155 = smul.u32 2, %s24
        %p156 = scmp.lt.s32.totalorder %s155, 3
        %s157 = scalar_select %p156, %s155, 3
        %s158 = smul.addr %s157, 2
        %s159 = smul.addr %s158, 4
        %s160 = scalar_lea.vmem %s1, %s159
        %p161 = pneg %p45
        %p162 = pneg %p42
        %p163 = pneg %p66
        %p164 = pneg %p63
        %p165 = pneg %p87
        %p166 = pneg %p84
        %p167 = pneg %p113
        %p168 = pneg %p110
        %s169 = sand.u32 %s100, 1
        %s170 = scalar_lea.sflag [#allocation5], %s169
        %s171 = sand.u32 %s100, 1
        %s172 = smul.addr %s171, 32
        %s173 = scalar_lea.vmem [#allocation4], %s172
        %s174 = smul.u32 2, %s24
        %p175 = scmp.lt.s32.totalorder %s174, 3
        %s176 = scalar_select %p175, %s174, 3
        %s177 = smul.addr %s176, 2
        %s178 = smul.addr %s177, 4
        %s179 = scalar_lea.vmem %s1, %s178
        %s180 = smul.u32 2, %s24
        %s181 = smul.u32 2, %s24
        %v183 = vld [vmem:[%s179] sm:$0xf]
        %v184 = vld [vmem:[%s179 + $0x4] sm:$0xf]
        %v185 = vld [vmem:[%s179 + $0x8] sm:$0xf]
        %v186 = vld [vmem:[%s179 + $0xc] sm:$0xf]
        %v187 = vld [vmem:[%s2] sm:$0xff]
        %v188 = vld [vmem:[%s2 + $0x8] sm:$0xf]
        %v189 = vld [vmem:[%s2 + $0xc] sm:$0xff]
        %v190 = vld [vmem:[%s2 + $0x14] sm:$0xf]
        %v191 = vld [vmem:[%s2 + $0x18] sm:$0xff]
        %v192 = vld [vmem:[%s2 + $0x20] sm:$0xf]
        %v193 = vld [vmem:[%s2 + $0x24] sm:$0xff]
        %v194 = vld [vmem:[%s2 + $0x2c] sm:$0xf]
        %v195 = vld [vmem:[%s2 + $0x30] sm:$0xff]
        %v196 = vld [vmem:[%s2 + $0x38] sm:$0xf]
        %v197 = vld [vmem:[%s2 + $0x3c] sm:$0xff]
        %v198 = vld [vmem:[%s2 + $0x44] sm:$0xf]
        %v199 = vld [vmem:[%s2 + $0x48] sm:$0xff]
        %v200 = vld [vmem:[%s2 + $0x50] sm:$0xf]
        %v201 = vld [vmem:[%s2 + $0x54] sm:$0xff]
        %v202 = vld [vmem:[%s2 + $0x5c] sm:$0xf]
        %v203 = vld [vmem:[%s2 + $0x60] sm:$0xff]
        %v204 = vld [vmem:[%s2 + $0x68] sm:$0xf]
        %v205 = vld [vmem:[%s2 + $0x6c] sm:$0xff]
        %v206 = vld [vmem:[%s2 + $0x74] sm:$0xf]
        %v207 = vld [vmem:[%s2 + $0x78] sm:$0xff]
        %v208 = vld [vmem:[%s2 + $0x80] sm:$0xf]
        %v209 = vld [vmem:[%s2 + $0x84] sm:$0xff]
        %v210 = vld [vmem:[%s2 + $0x8c] sm:$0xf]
        %v211 = vld [vmem:[%s2 + $0x90] sm:$0xff]
        %v212 = vld [vmem:[%s2 + $0x98] sm:$0xf]
        %v213 = vld [vmem:[%s2 + $0x9c] sm:$0xff]
        %v214 = vld [vmem:[%s2 + $0xa4] sm:$0xf]
        %v215 = vld [vmem:[%s2 + $0xa8] sm:$0xff]
        %v216 = vld [vmem:[%s2 + $0xb0] sm:$0xf]
        %v217 = vld [vmem:[%s2 + $0xb4] sm:$0xff]
        %v218 = vld [vmem:[%s2 + $0xbc] sm:$0xf]
        %v219 = vld [vmem:[%s3] sm:$0x7]
        %v221 = vlaneseq
        %v222 = vshrl.u32 %v221, 7
        %v223 = vsub.s32 0, %v222
        %v224 = vrot.slane %v219, %v223
        %v225 = vlaneseq
        %v226 = vshrl.u32 %v225, 7
        %v227 = vsub.s32 1, %v226
        %v228 = vrot.slane %v219, %v227
        %v229 = vlaneseq
        %v230 = vshrl.u32 %v229, 7
        %v231 = vsub.s32 2, %v230
        %v232 = vrot.slane %v219, %v231
        %v240 = vunpack.c.l.b16 %v183
        %v241 = vunpack.c.l.b16 %v184
        %v242 = vunpack.c.l.b16 %v185
        %v243 = vunpack.c.l.b16 %v186
        %v244 = vpack.c.b16 %v241, %v240
        %v245 = vpack.c.b16 %v243, %v242
        %v280 = vunpack.c.l.b16 %v187
        %v281 = vunpack.c.h.b16 %v187
        %v282 = vunpack.c.l.b16 %v188
        %v283 = vunpack.c.l.b16 %v189
        %v284 = vunpack.c.h.b16 %v189
        %v285 = vunpack.c.l.b16 %v190
        %v286 = vunpack.c.l.b16 %v191
        %v287 = vunpack.c.h.b16 %v191
        %v288 = vunpack.c.l.b16 %v192
        %v289 = vunpack.c.l.b16 %v193
        %v290 = vunpack.c.h.b16 %v193
        %v291 = vunpack.c.l.b16 %v194
        %v292 = vunpack.c.l.b16 %v195
        %v293 = vunpack.c.h.b16 %v195
        %v294 = vunpack.c.l.b16 %v196
        %v295 = vunpack.c.l.b16 %v197
        %v296 = vunpack.c.h.b16 %v197
        %v297 = vunpack.c.l.b16 %v198
        %v298 = vunpack.c.l.b16 %v199
        %v299 = vunpack.c.h.b16 %v199
        %v300 = vunpack.c.l.b16 %v200
        %v301 = vunpack.c.l.b16 %v201
        %v302 = vunpack.c.h.b16 %v201
        %v303 = vunpack.c.l.b16 %v202
        %v304 = vunpack.c.l.b16 %v203
        %v305 = vunpack.c.h.b16 %v203
        %v306 = vunpack.c.l.b16 %v204
        %v307 = vunpack.c.l.b16 %v205
        %v308 = vunpack.c.h.b16 %v205
        %v309 = vunpack.c.l.b16 %v206
        %v310 = vunpack.c.l.b16 %v207
        %v311 = vunpack.c.h.b16 %v207
        %v312 = vunpack.c.l.b16 %v208
        %v313 = vunpack.c.l.b16 %v209
        %v314 = vunpack.c.h.b16 %v209
        %v315 = vunpack.c.l.b16 %v210
        %v316 = vunpack.c.l.b16 %v211
        %v317 = vunpack.c.h.b16 %v211
        %v318 = vunpack.c.l.b16 %v212
        %v319 = vunpack.c.l.b16 %v213
        %v320 = vunpack.c.h.b16 %v213
        %v321 = vunpack.c.l.b16 %v214
        %v322 = vunpack.c.l.b16 %v215
        %v323 = vunpack.c.h.b16 %v215
        %v324 = vunpack.c.l.b16 %v216
        %v325 = vunpack.c.l.b16 %v217
        %v326 = vunpack.c.h.b16 %v217
        %v327 = vunpack.c.l.b16 %v218
        %v328 = vpack.c.b16 %v283, %v280
        %v329 = vpack.c.b16 %v284, %v281
        %v330 = vpack.c.b16 %v285, %v282
        %v331 = vpack.c.b16 %v289, %v286
        %v332 = vpack.c.b16 %v290, %v287
        %v333 = vpack.c.b16 %v291, %v288
        %v334 = vpack.c.b16 %v295, %v292
        %v335 = vpack.c.b16 %v296, %v293
        %v336 = vpack.c.b16 %v297, %v294
        %v337 = vpack.c.b16 %v301, %v298
        %v338 = vpack.c.b16 %v302, %v299
        %v339 = vpack.c.b16 %v303, %v300
        %v340 = vpack.c.b16 %v307, %v304
        %v341 = vpack.c.b16 %v308, %v305
        %v342 = vpack.c.b16 %v309, %v306
        %v343 = vpack.c.b16 %v313, %v310
        %v344 = vpack.c.b16 %v314, %v311
        %v345 = vpack.c.b16 %v315, %v312
        %v346 = vpack.c.b16 %v319, %v316
        %v347 = vpack.c.b16 %v320, %v317
        %v348 = vpack.c.b16 %v321, %v318
        %v349 = vpack.c.b16 %v325, %v322
        %v350 = vpack.c.b16 %v326, %v323
        %v351 = vpack.c.b16 %v327, %v324
        %376 = vmatprep.subr.bf16.mxu0 %v329
        %377 = vmatpush1.bf16.msra.mxu0 %v328
        %378 = vmatprep.subr.bf16.mxu0 %v332
        %379 = vmatpush1.bf16.msra.mxu0 %v331
        %380 = vmatprep.subr.bf16.mxu0 %v335
        %381 = vmatpush1.bf16.msra.mxu0 %v334
        %382 = vmatprep.subr.bf16.mxu0 %v338
        %383 = vmatpush1.bf16.msra.mxu0 %v337
        %384 = vmatprep.subr.bf16.mxu0 %v341
        %385 = vmatpush1.bf16.msra.mxu0 %v340
        %386 = vmatprep.subr.bf16.mxu0 %v344
        %387 = vmatpush1.bf16.msra.mxu0 %v343
        %388 = vmatprep.subr.bf16.mxu0 %v347
        %389 = vmatpush1.bf16.msra.mxu0 %v346
        %390 = vmatprep.subr.bf16.mxu0 %v350
        %391 = vmatpush1.bf16.msra.mxu0 %v349
        %392 = vmatprep.subr.bf16.mxu0 0
        %393 = vmatpush1.bf16.msra.mxu0 0
        %394 = vmatprep.subr.bf16.mxu0 0
        %395 = vmatpush1.bf16.msra.mxu0 0
        %396 = vmatprep.subr.bf16.mxu0 0
        %397 = vmatpush1.bf16.msra.mxu0 0
        %398 = vmatprep.subr.bf16.mxu0 0
        %399 = vmatpush1.bf16.msra.mxu0 0
        %400 = vmatprep.subr.bf16.mxu0 0
        %401 = vmatpush1.bf16.msra.mxu0 0
        %402 = vmatprep.subr.bf16.mxu0 0
        %403 = vmatpush1.bf16.msra.mxu0 0
        %404 = vmatprep.subr.bf16.mxu0 0
        %405 = vmatpush1.bf16.msra.mxu0 0
        %406 = vmatprep.subr.bf16.mxu0 0
        %407 = vmatpush1.bf16.msra.mxu0 0
        %408 = vmatprep.mubr.bf16.mxu0 0
        %409 = vmatmul.mubr.bf16.gmra.mrb[0].mxu0 %v244
        %v410 = vpop.f32.mrb[0].mxu0
        %v411 = vadd.f32 %v224, %v410
        %v412 = vpop.f32.mrb[0].mxu0
        %v413 = vadd.f32 %v228, %v412
        %v414 = vpop.f32.mrb[0].mxu0
        %v415 = vadd.f32 %v224, %v414
        %v416 = vpop.f32.mrb[0].mxu0
        %v417 = vadd.f32 %v228, %v416
        %418 = vmatprep.mubr.bf16.mxu0 0
        %419 = vmatmul.mubr.bf16.gmra.mrb[0].mxu0 %v245
        %v420 = vpop.f32.mrb[0].mxu0
        %v421 = vadd.f32 %v224, %v420
        %v422 = vpop.f32.mrb[0].mxu0
        %v423 = vadd.f32 %v228, %v422
        %v424 = vpop.f32.mrb[0].mxu0
        %v425 = vadd.f32 %v224, %v424
        %v426 = vpop.f32.mrb[0].mxu0
        %v427 = vadd.f32 %v228, %v426
        %428 = vdwg.mxu0
        %429 = vmatprep.subr.bf16.mxu0 0
        %430 = vmatpush1.bf16.msra.mxu0 %v330
        %431 = vmatprep.subr.bf16.mxu0 0
        %432 = vmatpush1.bf16.msra.mxu0 %v333
        %433 = vmatprep.subr.bf16.mxu0 0
        %434 = vmatpush1.bf16.msra.mxu0 %v336
        %435 = vmatprep.subr.bf16.mxu0 0
        %436 = vmatpush1.bf16.msra.mxu0 %v339
        %437 = vmatprep.subr.bf16.mxu0 0
        %438 = vmatpush1.bf16.msra.mxu0 %v342
        %439 = vmatprep.subr.bf16.mxu0 0
        %440 = vmatpush1.bf16.msra.mxu0 %v345
        %441 = vmatprep.subr.bf16.mxu0 0
        %442 = vmatpush1.bf16.msra.mxu0 %v348
        %443 = vmatprep.subr.bf16.mxu0 0
        %444 = vmatpush1.bf16.msra.mxu0 %v351
        %445 = vmatprep.subr.bf16.mxu0 0
        %446 = vmatpush1.bf16.msra.mxu0 0
        %447 = vmatprep.subr.bf16.mxu0 0
        %448 = vmatpush1.bf16.msra.mxu0 0
        %449 = vmatprep.subr.bf16.mxu0 0
        %450 = vmatpush1.bf16.msra.mxu0 0
        %451 = vmatprep.subr.bf16.mxu0 0
        %452 = vmatpush1.bf16.msra.mxu0 0
        %453 = vmatprep.subr.bf16.mxu0 0
        %454 = vmatpush1.bf16.msra.mxu0 0
        %455 = vmatprep.subr.bf16.mxu0 0
        %456 = vmatpush1.bf16.msra.mxu0 0
        %457 = vmatprep.subr.bf16.mxu0 0
        %458 = vmatpush1.bf16.msra.mxu0 0
        %459 = vmatprep.subr.bf16.mxu0 0
        %460 = vmatpush1.bf16.msra.mxu0 0
        %461 = vmatprep.mubr.bf16.mxu0 0
        %462 = vmatmul.mubr.bf16.gmra.mrb[0].mxu0 %v244
        %v463 = vpop.f32.mrb[0].mxu0
        %v464 = vadd.f32 %v232, %v463
        %v465 = vpop.f32.mrb[0].mxu0
        %v466 = vpop.f32.mrb[0].mxu0
        %v467 = vadd.f32 %v232, %v466
        %v468 = vpop.f32.mrb[0].mxu0
        %469 = vmatprep.mubr.bf16.mxu0 0
        %470 = vmatmul.mubr.bf16.gmra.mrb[0].mxu0 %v245
        %v471 = vpop.f32.mrb[0].mxu0
        %v472 = vadd.f32 %v232, %v471
        %v473 = vpop.f32.mrb[0].mxu0
        %v474 = vpop.f32.mrb[0].mxu0
        %v475 = vadd.f32 %v232, %v474
        %v476 = vpop.f32.mrb[0].mxu0
        %477 = vdwg.mxu0
        %v478 = vlaneseq
        %v479 = vshrl.u32 %v478, 7
        %v480 = vadd.s32 %v479, 8
        %v481 = vlaneseq
        %v482 = vand.u32 %v481, 127
        %v483 = vpack.c.bf16 %v415, %v411
        %v484 = vpack.c.bf16 %v417, %v413
        %v485 = vpack.c.bf16 %v467, %v464
        %486 = vmatprep.subr.bf16.mxu0 0
        %487 = vmatpush1.bf16.xpose.msra.mxu0 %v484
        %488 = vmatprep.subr.bf16.mxu0 0
        %489 = vmatpush1.bf16.xpose.msra.mxu0 0
        %490 = vmatprep.subr.bf16.mxu0 0
        %491 = vmatpush1.bf16.xpose.msra.mxu0 0
        %492 = vmatprep.subr.bf16.mxu0 0
        %493 = vmatpush1.bf16.xpose.msra.mxu0 0
        %494 = vmatprep.subr.bf16.mxu0 0
        %495 = vmatpush1.bf16.xpose.msra.mxu0 0
        %496 = vmatprep.subr.bf16.mxu0 0
        %497 = vmatpush1.bf16.xpose.msra.mxu0 0
        %498 = vmatprep.subr.bf16.mxu0 0
        %499 = vmatpush1.bf16.xpose.msra.mxu0 0
        %500 = vmatprep.subr.bf16.mxu0 0
        %501 = vmatpush1.bf16.xpose.msra.mxu0 0
        %502 = vmatprep.subr.bf16.mxu0 0
        %503 = vmatpush1.bf16.xpose.msra.mxu0 0
        %504 = vmatprep.subr.bf16.mxu0 0
        %505 = vmatpush1.bf16.xpose.msra.mxu0 0
        %506 = vmatprep.subr.bf16.mxu0 0
        %507 = vmatpush1.bf16.xpose.msra.mxu0 0
        %508 = vmatprep.subr.bf16.mxu0 0
        %509 = vmatpush1.bf16.xpose.msra.mxu0 0
        %510 = vmatprep.subr.bf16.mxu0 0
        %511 = vmatpush1.bf16.xpose.msra.mxu0 0
        %512 = vmatprep.subr.bf16.mxu0 0
        %513 = vmatpush1.bf16.xpose.msra.mxu0 0
        %514 = vmatprep.subr.bf16.mxu0 0
        %515 = vmatpush1.bf16.xpose.msra.mxu0 0
        %516 = vmatprep.subr.bf16.mxu0 0
        %517 = vmatpush1.bf16.xpose.msra.mxu0 0
        %518 = vmatprep.mubr.bf16.mxu0 0
        %519 = vmatmul.mubr.bf16.gmra.mrb[0].mxu0 %v483
        %v520 = vpop.f32.mrb[0].mxu0
        %v521 = vadd.f32 0.0, %v520
        %v522 = vpop.f32.mrb[0].mxu0
        %v523 = vpop.f32.mrb[0].mxu0
        %v524 = vadd.f32 0.0, %v523
        %v525 = vpop.f32.mrb[0].mxu0
        %526 = vdwg.mxu0
        %s527 = smul.u32 %s24, 2
        %s528 = sld [smem:[#allocation3 + %s527]]
        %v529 = vstv %s528
        %vm530 = vcmp.lt.s32.totalorder %v479, %v529
        %vm531 = vcmp.lt.s32.totalorder %v480, %v529
        %vm532 = vcmp.lt.s32.totalorder %v482, %v529
        %v533 = vsel %vm530, 1, 0
        %v534 = vsel %vm531, 1, 0
        %vm535 = vcmp.eq.s32.totalorder %v533, 1
        %vm536 = vcmp.eq.s32.totalorder %v534, 1
        %v537 = vsel %vm532, 1, 0
        %vm538 = vcmp.eq.s32.totalorder %v537, 1
        %vm539 = vmand %vm535, %vm538
        %vm540 = vmand %vm536, %vm538
        %v541 = vsel %vm539, %v521, -1e+09
        %v542 = vsel %vm540, %v524, -1e+09
        %vm543 = vcmask 130048
        %v544 = vsel %vm543, %v541, -inf
        %545 = vmax.xlane.f32.xlu0 %v544
        %v546 = vpop.xlane.xlu0 %545
        %v547 = vsel %vm543, %v542, -inf
        %548 = vmax.xlane.f32.xlu0 %v547
        %v549 = vpop.xlane.xlu0 %548
        %v550 = vsub.f32 %v541, %v546
        %v551 = vsub.f32 %v542, %v549
        %v552 = vmul.f32 %v550, 1.442695
        %v553 = vpow.pop %v552
        %v554 = vmul.f32 %v551, 1.442695
        %v555 = vpow.pop %v554
        %v556 = vsel %vm543, %v553, 0.0
        %557 = vadd.xlane.f32.xlu0 %v556
        %v558 = vpop.xlane.xlu0 %557
        %v559 = vsel %vm543, %v555, 0.0
        %560 = vadd.xlane.f32.xlu0 %v559
        %v561 = vpop.xlane.xlu0 %560
        %v562 = vrcp.pop %v558
        %v563 = vmul.f32 %v553, %v562
        %v564 = vrcp.pop %v561
        %v565 = vmul.f32 %v555, %v564
        %v566 = vpack.c.bf16 %v565, %v563
        %v568 = vsel %vm543, %v566, 0
        %570 = vmatprep.subr.bf16.mxu0 0
        %571 = vmatpush1.bf16.msra.mxu0 %v485
        %572 = vmatprep.subr.bf16.mxu0 0
        %573 = vmatpush1.bf16.msra.mxu0 0
        %574 = vmatprep.subr.bf16.mxu0 0
        %575 = vmatpush1.bf16.msra.mxu0 0
        %576 = vmatprep.subr.bf16.mxu0 0
        %577 = vmatpush1.bf16.msra.mxu0 0
        %578 = vmatprep.subr.bf16.mxu0 0
        %579 = vmatpush1.bf16.msra.mxu0 0
        %580 = vmatprep.subr.bf16.mxu0 0
        %581 = vmatpush1.bf16.msra.mxu0 0
        %582 = vmatprep.subr.bf16.mxu0 0
        %583 = vmatpush1.bf16.msra.mxu0 0
        %584 = vmatprep.subr.bf16.mxu0 0
        %585 = vmatpush1.bf16.msra.mxu0 0
        %586 = vmatprep.subr.bf16.mxu0 0
        %587 = vmatpush1.bf16.msra.mxu0 0
        %588 = vmatprep.subr.bf16.mxu0 0
        %589 = vmatpush1.bf16.msra.mxu0 0
        %590 = vmatprep.subr.bf16.mxu0 0
        %591 = vmatpush1.bf16.msra.mxu0 0
        %592 = vmatprep.subr.bf16.mxu0 0
        %593 = vmatpush1.bf16.msra.mxu0 0
        %594 = vmatprep.subr.bf16.mxu0 0
        %595 = vmatpush1.bf16.msra.mxu0 0
        %596 = vmatprep.subr.bf16.mxu0 0
        %597 = vmatpush1.bf16.msra.mxu0 0
        %598 = vmatprep.subr.bf16.mxu0 0
        %599 = vmatpush1.bf16.msra.mxu0 0
        %600 = vmatprep.subr.bf16.mxu0 0
        %601 = vmatpush1.bf16.msra.mxu0 0
        %602 = vmatprep.mubr.bf16.mxu0 0
        %603 = vmatmul.mubr.bf16.gmra.mrb[0].mxu0 %v568
        %v604 = vpop.f32.mrb[0].mxu0
        %v605 = vadd.f32 0.0, %v604
        %v606 = vpop.f32.mrb[0].mxu0
        %v607 = vpop.f32.mrb[0].mxu0
        %v608 = vadd.f32 0.0, %v607
        %v609 = vpop.f32.mrb[0].mxu0
        %610 = vdwg.mxu0
        %611 = vst [vmem:[%s173] sm:$0xff] %v605
        %612 = vst [vmem:[%s173 + $0x8] sm:$0xff] %v608
        %v613 = vpack.c.bf16 %v425, %v421
        %v614 = vpack.c.bf16 %v427, %v423
        %v615 = vpack.c.bf16 %v475, %v472
        %616 = vmatprep.subr.bf16.mxu0 0
        %617 = vmatpush1.bf16.xpose.msra.mxu0 %v614
        %618 = vmatprep.subr.bf16.mxu0 0
        %619 = vmatpush1.bf16.xpose.msra.mxu0 0
        %620 = vmatprep.subr.bf16.mxu0 0
        %621 = vmatpush1.bf16.xpose.msra.mxu0 0
        %622 = vmatprep.subr.bf16.mxu0 0
        %623 = vmatpush1.bf16.xpose.msra.mxu0 0
        %624 = vmatprep.subr.bf16.mxu0 0
        %625 = vmatpush1.bf16.xpose.msra.mxu0 0
        %626 = vmatprep.subr.bf16.mxu0 0
        %627 = vmatpush1.bf16.xpose.msra.mxu0 0
        %628 = vmatprep.subr.bf16.mxu0 0
        %629 = vmatpush1.bf16.xpose.msra.mxu0 0
        %630 = vmatprep.subr.bf16.mxu0 0
        %631 = vmatpush1.bf16.xpose.msra.mxu0 0
        %632 = vmatprep.subr.bf16.mxu0 0
        %633 = vmatpush1.bf16.xpose.msra.mxu0 0
        %634 = vmatprep.subr.bf16.mxu0 0
        %635 = vmatpush1.bf16.xpose.msra.mxu0 0
        %636 = vmatprep.subr.bf16.mxu0 0
        %637 = vmatpush1.bf16.xpose.msra.mxu0 0
        %638 = vmatprep.subr.bf16.mxu0 0
        %639 = vmatpush1.bf16.xpose.msra.mxu0 0
        %640 = vmatprep.subr.bf16.mxu0 0
        %641 = vmatpush1.bf16.xpose.msra.mxu0 0
        %642 = vmatprep.subr.bf16.mxu0 0
        %643 = vmatpush1.bf16.xpose.msra.mxu0 0
        %644 = vmatprep.subr.bf16.mxu0 0
        %645 = vmatpush1.bf16.xpose.msra.mxu0 0
        %646 = vmatprep.subr.bf16.mxu0 0
        %647 = vmatpush1.bf16.xpose.msra.mxu0 0
        %648 = vmatprep.mubr.bf16.mxu0 0
        %649 = vmatmul.mubr.bf16.gmra.mrb[0].mxu0 %v613
        %v650 = vpop.f32.mrb[0].mxu0
        %v651 = vadd.f32 0.0, %v650
        %v652 = vpop.f32.mrb[0].mxu0
        %v653 = vpop.f32.mrb[0].mxu0
        %v654 = vadd.f32 0.0, %v653
        %v655 = vpop.f32.mrb[0].mxu0
        %656 = vdwg.mxu0
        %s657 = sadd.s32 %s527, 1
        %s658 = sld [smem:[#allocation3 + %s657]]
        %v659 = vstv %s658
        %vm660 = vcmp.lt.s32.totalorder %v479, %v659
        %vm661 = vcmp.lt.s32.totalorder %v480, %v659
        %vm662 = vcmp.lt.s32.totalorder %v482, %v659
        %v663 = vsel %vm660, 1, 0
        %v664 = vsel %vm661, 1, 0
        %vm665 = vcmp.eq.s32.totalorder %v663, 1
        %vm666 = vcmp.eq.s32.totalorder %v664, 1
        %v667 = vsel %vm662, 1, 0
        %vm668 = vcmp.eq.s32.totalorder %v667, 1
        %vm669 = vmand %vm665, %vm668
        %vm670 = vmand %vm666, %vm668
        %v671 = vsel %vm669, %v651, -1e+09
        %v672 = vsel %vm670, %v654, -1e+09
        %v673 = vsel %vm543, %v671, -inf
        %674 = vmax.xlane.f32.xlu0 %v673
        %v675 = vpop.xlane.xlu0 %674
        %v676 = vsel %vm543, %v672, -inf
        %677 = vmax.xlane.f32.xlu0 %v676
        %v678 = vpop.xlane.xlu0 %677
        %v679 = vsub.f32 %v671, %v675
        %v680 = vsub.f32 %v672, %v678
        %v681 = vmul.f32 %v679, 1.442695
        %v682 = vpow.pop %v681
        %v683 = vmul.f32 %v680, 1.442695
        %v684 = vpow.pop %v683
        %v685 = vsel %vm543, %v682, 0.0
        %686 = vadd.xlane.f32.xlu0 %v685
        %v687 = vpop.xlane.xlu0 %686
        %v688 = vsel %vm543, %v684, 0.0
        %689 = vadd.xlane.f32.xlu0 %v688
        %v690 = vpop.xlane.xlu0 %689
        %v691 = vrcp.pop %v687
        %v692 = vmul.f32 %v682, %v691
        %v693 = vrcp.pop %v690
        %v694 = vmul.f32 %v684, %v693
        %v695 = vpack.c.bf16 %v694, %v692
        %v697 = vsel %vm543, %v695, 0
        %699 = vmatprep.subr.bf16.mxu0 0
        %700 = vmatpush1.bf16.msra.mxu0 %v615
        %701 = vmatprep.subr.bf16.mxu0 0
        %702 = vmatpush1.bf16.msra.mxu0 0
        %703 = vmatprep.subr.bf16.mxu0 0
        %704 = vmatpush1.bf16.msra.mxu0 0
        %705 = vmatprep.subr.bf16.mxu0 0
        %706 = vmatpush1.bf16.msra.mxu0 0
        %707 = vmatprep.subr.bf16.mxu0 0
        %708 = vmatpush1.bf16.msra.mxu0 0
        %709 = vmatprep.subr.bf16.mxu0 0
        %710 = vmatpush1.bf16.msra.mxu0 0
        %711 = vmatprep.subr.bf16.mxu0 0
        %712 = vmatpush1.bf16.msra.mxu0 0
        %713 = vmatprep.subr.bf16.mxu0 0
        %714 = vmatpush1.bf16.msra.mxu0 0
        %715 = vmatprep.subr.bf16.mxu0 0
        %716 = vmatpush1.bf16.msra.mxu0 0
        %717 = vmatprep.subr.bf16.mxu0 0
        %718 = vmatpush1.bf16.msra.mxu0 0
        %719 = vmatprep.subr.bf16.mxu0 0
        %720 = vmatpush1.bf16.msra.mxu0 0
        %721 = vmatprep.subr.bf16.mxu0 0
        %722 = vmatpush1.bf16.msra.mxu0 0
        %723 = vmatprep.subr.bf16.mxu0 0
        %724 = vmatpush1.bf16.msra.mxu0 0
        %725 = vmatprep.subr.bf16.mxu0 0
        %726 = vmatpush1.bf16.msra.mxu0 0
        %727 = vmatprep.subr.bf16.mxu0 0
        %728 = vmatpush1.bf16.msra.mxu0 0
        %729 = vmatprep.subr.bf16.mxu0 0
        %730 = vmatpush1.bf16.msra.mxu0 0
        %731 = vmatprep.mubr.bf16.mxu0 0
        %732 = vmatmul.mubr.bf16.gmra.mrb[0].mxu0 %v697
        %v733 = vpop.f32.mrb[0].mxu0
        %v734 = vadd.f32 0.0, %v733
        %v735 = vpop.f32.mrb[0].mxu0
        %v736 = vpop.f32.mrb[0].mxu0
        %v737 = vadd.f32 0.0, %v736
        %v738 = vpop.f32.mrb[0].mxu0
        %739 = vdwg.mxu0
        %s740 = scalar_lea.vmem %s173, 16 [#allocation4]
        %741 = vst [vmem:[%s740] sm:$0xff] %v734
        %742 = vst [vmem:[%s740 + $0x8] sm:$0xff] %v737
        %s743 = sand.u32 %s100, 1
        %s744 = scalar_lea.sflag [#allocation5], %s743
        %s745 = sand.u32 %s100, 1
        %s746 = smul.addr %s745, 32
        %s747 = scalar_lea.vmem [#allocation4], %s746
        // Predicated region
        $region33: #{attention_head.1} parent=31 // pred_check
          %p748 = pneg %p110
        $region34: #{attention_head.1} parent=31 // pred_check_branch
          %750 = sbr.rel (%p748) target = $region36
        $region35: #{attention_head.1} parent=31 // pred_region
          %s751 = smul.u32 2, %s24
          %s753 = ssub.s32 512, 512
          %754 = vsyncadd %s744, %s753
          %s755 = smul.addr %s751, 2
          %s756 = smul.addr %s755, 128
          %s757 = scalar_lea.hbm %s4, %s756
          %s758 = sshll.u32 %s747, 4
          %s759 = int_to_ptr.vmem [resolvable:$true] %s758
          %764 = dma.vmem_to_hbm [thread:$0]  %s759, 512, %s757, %s744, 128, 128, 8
        $region36: #{attention_head.1} parent=31 // pred_fallthru
          _
      $region32: #{attention_head.1} parent=5 // pred_fallthru
        _
      %p765 = scmp.le.s32.totalorder 2, %s19
      // Predicated region
      $region37: #{attention_head.1} parent=5 // pred_check
        %p766 = pneg %p765
      $region38: #{attention_head.1} parent=5 // pred_check_branch
        %768 = sbr.rel (%p766) target = $region40
      $region39: #{attention_head.1} parent=5 // pred_region
        %s769 = ssub.s32 %s19, 2
        // Predicated region
        $region41: #{attention_head.1} parent=39 // pred_check
          %p770 = pneg %p116
        $region42: #{attention_head.1} parent=39 // pred_check_branch
          %772 = sbr.rel (%p770) target = $region44
        $region43: #{attention_head.1} parent=39 // pred_region
          %s773 = sand.u32 %s101, 1
          %s774 = scalar_lea.sflag [#allocation5], %s773
          %s775 = sand.u32 %s101, 1
          %s776 = smul.addr %s775, 32
          %s777 = scalar_lea.vmem [#allocation4], %s776
          %778 = dma.done %s774, 512
        $region44: #{attention_head.1} parent=39 // pred_fallthru
          _
      $region40: #{attention_head.1} parent=5 // pred_fallthru
        _
    $region6: #{attention_head.1} parent=1 // loop_footer
      %s23 = sadd.s32 1, %s19
    $region7: #{attention_head.1} parent=1 // loop_footer_branch
      %18 = sbr.rel target = $region3
    $region8: #{attention_head.1} parent=1 // loop_exit
      _
    %779 = vsyncpa [#allocation5], 1
    %s780 = scalar_lea.sflag [#allocation5], 1
    %781 = vsyncpa %s780, 1

</llo_original>
